<compile_context>
chip_gen: v5e
topology: v5e:2x2
jax: 0.10.0
libtpu: 0.0.40
codegen_flags: <defaults>
</compile_context>

<pallas_src>
import functools

import jax
import jax.numpy as jnp
from jax.experimental import pallas as pl
from jax.experimental.pallas import tpu as pltpu


# ---------------------------------------------------------------------------
# Kernel
# ---------------------------------------------------------------------------
def _downsample_kernel(ee_ref, eo_ref, oe_ref, oo_ref, w_ref, b_ref, o_ref):
    """One (batch, row-tile, cout-tile) step of the 3x3 / stride-2 / pad-1 conv.

    ee_ref: (TH+1, Wo+1, Cin)  even-row / even-col phase, incl. +1 halo row
    eo_ref: (TH+1, Wo,   Cin)  even-row / odd-col  phase, incl. +1 halo row
    oe_ref: (TH,   Wo+1, Cin)  odd-row  / even-col phase
    oo_ref: (TH,   Wo,   Cin)  odd-row  / odd-col  phase
    w_ref : (9*Cin, TCout)     weights, (kh, kw, cin)-major rows
    b_ref : (1, TCout)         bias (f32)
    o_ref : (TH, Wo, TCout)    output tile (NHWC)
    """
    th, wo, cin = oo_ref.shape
    tcout = o_ref.shape[-1]

    # The nine conv taps in (kh, kw) order; every one is a contiguous
    # (TH, Wo, Cin) slice of a phase tile (no stride-2 gathers in-kernel).
    taps = (
        ee_ref[0:th, 0:wo],     eo_ref[0:th, :],     ee_ref[0:th, 1:wo + 1],      # kh=0
        oe_ref[:, 0:wo],        oo_ref[...],         oe_ref[:, 1:wo + 1],         # kh=1
        ee_ref[1:th + 1, 0:wo], eo_ref[1:th + 1, :], ee_ref[1:th + 1, 1:wo + 1],  # kh=2
    )

    if cin >= 128:
        # Realistic diffusion-UNet channels: nine K=Cin MXU matmuls accumulated
        # in f32 -- no (TH*Wo, 9*Cin) im2col temp, no channel-concat copies.
        acc = jnp.zeros((th * wo, tcout), dtype=jnp.float32)
        for k, tap in enumerate(taps):
            acc = acc + jnp.dot(
                tap.reshape(th * wo, cin).astype(w_ref.dtype),
                w_ref[k * cin:(k + 1) * cin, :],
                preferred_element_type=jnp.float32)
    else:
        # Tiny Cin: per-tap K would badly underfill the MXU, so fuse the nine
        # taps into one K = 9*Cin matmul (the im2col temp is small here).
        patches = jnp.concatenate(
            [t.reshape(th * wo, cin) for t in taps], axis=1).astype(w_ref.dtype)
        acc = jnp.dot(patches, w_ref[...], preferred_element_type=jnp.float32)

    acc = acc + b_ref[...].astype(jnp.float32)
    o_ref[...] = acc.reshape(th, wo, tcout).astype(o_ref.dtype)


# ---------------------------------------------------------------------------
# Tiling plan (generation-aware)
# ---------------------------------------------------------------------------
def _vmem_capacity_bytes():
    try:
        cap = getattr(pltpu.get_tpu_info(), "vmem_capacity_bytes", None)
        if cap:
            return int(cap)
    except Exception:
        pass
    return 64 * 1024 * 1024  # conservative default: v7x per-TensorCore VMEM


def _plan_tiles(n, ho, wo, cin, cout, act_bytes, w_bytes, out_bytes):
    """Pick (TH, TCout, vmem_limit_bytes): the largest row / Cout tiles whose
    double-buffered pipeline blocks plus in-kernel temporaries fit comfortably
    in this generation's VMEM."""
    phys = _vmem_capacity_bytes()
    vmem_limit = min(3 * phys // 4, 96 * 1024 * 1024)   # ~96 MiB v5e/v6e, ~48 MiB v7x
    tile_budget = vmem_limit // 2                       # headroom for Mosaic scratch

    # --- Cout tiling (lane-aligned) bounds the resident weight block. ----------
    def w_block_bytes(tc):
        return 2 * (9 * cin * tc * w_bytes + tc * 4)    # double-buffered w + bias

    tcout = cout
    if cout > 128 and w_block_bytes(cout) > tile_budget // 3:
        for d in range(128, cout, 128):                 # largest fitting 128-mult divisor
            if cout % d == 0 and w_block_bytes(d) <= tile_budget // 3:
                tcout = d
    n_co = cout // tcout

    # --- H tiling: largest divisor of Ho whose per-step working set fits. ------
    def step_bytes(th):
        inp = 2 * act_bytes * cin * ((th + 1) * (wo + 1) + (th + 1) * wo
                                     + th * (wo + 1) + th * wo)
        out = 2 * th * wo * tcout * out_bytes
        acc = 4 * th * wo * tcout
        if cin >= 128:
            tmp = 3 * th * wo * cin * act_bytes          # shifted-tap relayout copies
        else:
            tmp = 2 * th * wo * 9 * cin * act_bytes      # im2col patches + concat temps
        return inp + w_block_bytes(tcout) + out + acc + tmp

    divisors = [d for d in range(1, ho + 1) if ho % d == 0]
    fitting = [d for d in divisors if step_bytes(d) <= tile_budget]
    th = max(fitting) if fitting else 1

    # v7x megacore / pipeline occupancy: avoid a single-step grid when N == 1.
    if n == 1 and n_co == 1 and th == ho and ho > 1:
        smaller = [d for d in fitting if d < ho]
        if smaller:
            th = max(smaller)
    return th, tcout, vmem_limit


# ---------------------------------------------------------------------------
# Wrapper
# ---------------------------------------------------------------------------
@functools.partial(jax.jit, static_argnames=("matmul_dtype",))
def downsample(x_nchw, weight_oihw, bias, matmul_dtype=None):
    """Conv2d(in_ch, out_ch, kernel_size=3, stride=2, padding=1) forward.

    x_nchw:       (N, Cin, H, W)
    weight_oihw:  (Cout, Cin, 3, 3)   (PyTorch layout)
    bias:         (Cout,)
    matmul_dtype: optional MXU input dtype (e.g. jnp.bfloat16); the cast happens
                  in HBM (halves DMA bytes), accumulation stays f32.  None keeps
                  exact f32 semantics.
    returns:      (N, Cout, Ho, Wo) with Ho = floor((H-1)/2)+1, Wo likewise.
    """
    n, cin, h, w = x_nchw.shape
    cout = weight_oihw.shape[0]
    ho = (h - 1) // 2 + 1
    wo = (w - 1) // 2 + 1
    hp = 2 * (ho + 1)                      # padded sizes, rounded up to even
    wp = 2 * (wo + 1)

    # ---- plain-JAX glue (fused by XLA under jit) ------------------------------
    x_nhwc = jnp.transpose(x_nchw, (0, 2, 3, 1))
    # 1 zero row/col on top/left (torch padding=1); bottom/right padded up to the
    # even alignment size -- the alignment extras are never read by any tap.
    x_pad = jnp.pad(x_nhwc, ((0, 0), (1, hp - h - 1), (1, wp - w - 1), (0, 0)))

    # Space-to-depth phase split: phase (a, b) holds padded_x[2i+a, 2j+b]; the
    # odd-col phases only need Wo columns (kw=1 taps never read column Wo).
    x_ph = x_pad.reshape(n, ho + 1, 2, wo + 1, 2, cin)
    ee = x_ph[:, :, 0, :, 0, :]        # (N, Ho+1, Wo+1, Cin)
    eo = x_ph[:, :, 0, :wo, 1, :]      # (N, Ho+1, Wo,   Cin)
    oe = x_ph[:, :ho, 1, :, 0, :]      # (N, Ho,   Wo+1, Cin)
    oo = x_ph[:, :ho, 1, :wo, 1, :]    # (N, Ho,   Wo,   Cin)

    # weights: OIHW -> HWIO -> (9*Cin, Cout), (kh, kw, cin)-major; bias -> (1, Cout) f32.
    w_mat = jnp.transpose(weight_oihw, (2, 3, 1, 0)).reshape(9 * cin, cout)
    b_mat = bias.reshape(1, cout).astype(jnp.float32)

    if matmul_dtype is not None:
        # Cast in HBM so the DMAs carry the narrow dtype (not just an on-chip cast).
        ee, eo, oe, oo = [a.astype(matmul_dtype) for a in (ee, eo, oe, oo)]
        w_mat = w_mat.astype(matmul_dtype)

    act_bytes = ee.dtype.itemsize
    w_bytes = w_mat.dtype.itemsize
    out_bytes = x_nchw.dtype.itemsize

    th, tcout, vmem_limit = _plan_tiles(n, ho, wo, cin, cout,
                                        act_bytes, w_bytes, out_bytes)
    n_t = ho // th
    n_co = cout // tcout

    # Even-row phases as overlapping (TH+1)-row tiles (wrapper-side halo): the
    # kernel needs no concatenates and no separate halo DMAs.
    if n_t == 1:
        ee_t, eo_t = ee, eo                      # already (N, TH+1, ., Cin)
    else:
        ee_t = jnp.stack([ee[:, t * th:t * th + th + 1] for t in range(n_t)],
                         axis=1).reshape(n * n_t, th + 1, wo + 1, cin)
        eo_t = jnp.stack([eo[:, t * th:t * th + th + 1] for t in range(n_t)],
                         axis=1).reshape(n * n_t, th + 1, wo, cin)

    grid = (n, n_t, n_co)

    ee_spec = pl.BlockSpec((None, th + 1, wo + 1, cin),
                           lambda b, t, c: (b * n_t + t, 0, 0, 0))
    eo_spec = pl.BlockSpec((None, th + 1, wo, cin),
                           lambda b, t, c: (b * n_t + t, 0, 0, 0))
    oe_spec = pl.BlockSpec((None, th, wo + 1, cin), lambda b, t, c: (b, t, 0, 0))
    oo_spec = pl.BlockSpec((None, th, wo, cin), lambda b, t, c: (b, t, 0, 0))
    w_spec = pl.BlockSpec((9 * cin, tcout), lambda b, t, c: (0, c))
    b_spec = pl.BlockSpec((1, tcout), lambda b, t, c: (0, c))
    o_spec = pl.BlockSpec((None, th, wo, tcout), lambda b, t, c: (b, t, 0, c))

    flops = 2 * n * ho * wo * 9 * cin * cout
    in_bytes = n * cin * act_bytes * ((ho + 1) * (wo + 1) + (ho + 1) * wo
                                      + ho * (wo + 1) + ho * wo)
    w_reads = (n * n_t) if n_co > 1 else 1
    bytes_accessed = (in_bytes
                      + w_reads * (9 * cin * cout * w_bytes + cout * 4)
                      + n * ho * wo * cout * out_bytes)

    out_nhwc = pl.pallas_call(
        _downsample_kernel,
        out_shape=jax.ShapeDtypeStruct((n, ho, wo, cout), x_nchw.dtype),
        grid_spec=pltpu.PrefetchScalarGridSpec(
            num_scalar_prefetch=0,
            grid=grid,
            in_specs=[ee_spec, eo_spec, oe_spec, oo_spec, w_spec, b_spec],
            out_specs=o_spec,
        ),
        compiler_params=pltpu.CompilerParams(
            dimension_semantics=("parallel", "parallel", "parallel"),
            vmem_limit_bytes=int(vmem_limit),
        ),
        cost_estimate=pl.CostEstimate(flops=int(flops), transcendentals=0,
                                      bytes_accessed=int(bytes_accessed)),
    )(ee_t, eo_t, oe, oo, w_mat, b_mat)

    # NHWC -> NCHW for the module's public interface.
    return jnp.transpose(out_nhwc, (0, 3, 1, 2))


# ---------------------------------------------------------------------------
# Self-test
# ---------------------------------------------------------------------------
if __name__ == "__main__":
    key = jax.random.PRNGKey(0)
    k_x, k_w, k_b, k_x2, k_w2, k_b2 = jax.random.split(key, 6)

    def ref_conv(x, wgt, b):
        return jax.lax.conv_general_dilated(
            x, wgt, window_strides=(2, 2), padding=((1, 1), (1, 1)),
            dimension_numbers=("NCHW", "OIHW", "NCHW"),
        ) + b.reshape(1, -1, 1, 1)

    # Case 1: even spatial size, out_ch == in_ch (module default).
    N, C_IN, H, W = 2, 4, 16, 16
    C_OUT = C_IN
    bound = 1.0 / ((C_IN * 9) ** 0.5)
    x = jax.random.normal(k_x, (N, C_IN, H, W), dtype=jnp.float32)
    weight = jax.random.uniform(k_w, (C_OUT, C_IN, 3, 3),
                                minval=-bound, maxval=bound, dtype=jnp.float32)
    bias = jax.random.uniform(k_b, (C_OUT,),
                              minval=-bound, maxval=bound, dtype=jnp.float32)
    out = jax.block_until_ready(downsample(x, weight, bias))
    ref = ref_conv(x, weight, bias)
    assert out.shape == (N, C_OUT, H // 2, W // 2)
    assert jnp.allclose(out, ref, atol=1e-4, rtol=1e-4)

    # Case 2: odd spatial size, N=1, Cout != Cin (exercises overlapping row tiles
    # and the single-batch occupancy cap).
    N2, C_IN2, C_OUT2, H2, W2 = 1, 4, 8, 15, 15
    bound2 = 1.0 / ((C_IN2 * 9) ** 0.5)
    x2 = jax.random.normal(k_x2, (N2, C_IN2, H2, W2), dtype=jnp.float32)
    w2 = jax.random.uniform(k_w2, (C_OUT2, C_IN2, 3, 3),
                            minval=-bound2, maxval=bound2, dtype=jnp.float32)
    b2 = jax.random.uniform(k_b2, (C_OUT2,),
                            minval=-bound2, maxval=bound2, dtype=jnp.float32)
    out2 = jax.block_until_ready(downsample(x2, w2, b2))
    ref2 = ref_conv(x2, w2, b2)
    assert out2.shape == (N2, C_OUT2, (H2 + 1) // 2, (W2 + 1) // 2)
    assert jnp.allclose(out2, ref2, atol=1e-4, rtol=1e-4)

    print("KERNEL_OK")
</pallas_src>

<mosaic_0001>
module attributes {stable_mosaic.version = 11 : i64} {
  func.func @_downsample_kernel(%arg0: i32, %arg1: i32, %arg2: i32, %arg3: memref<1x9x9x4xf32, #tpu.memory_space<vmem>>, %arg4: memref<1x9x8x4xf32, #tpu.memory_space<vmem>>, %arg5: memref<1x8x9x4xf32, #tpu.memory_space<vmem>>, %arg6: memref<1x8x8x4xf32, #tpu.memory_space<vmem>>, %arg7: memref<36x4xf32, #tpu.memory_space<vmem>>, %arg8: memref<1x4xf32, #tpu.memory_space<vmem>>, %arg9: memref<1x8x8x4xf32, #tpu.memory_space<vmem>>) attributes {dimension_semantics = [#tpu.dimension_semantics<parallel>, #tpu.dimension_semantics<parallel>, #tpu.dimension_semantics<parallel>], iteration_bounds = array<i64: 2, 1, 1>, scalar_prefetch = 0 : i64, scratch_operands = 0 : i64, tpu.core_type = #tpu.core_type<tc>, window_params = [{transform_indices = @transform_0, window_bounds = array<i64: 1, 9, 9, 4>}, {transform_indices = @transform_1, window_bounds = array<i64: 1, 9, 8, 4>}, {transform_indices = @transform_2, window_bounds = array<i64: 1, 8, 9, 4>}, {transform_indices = @transform_3, window_bounds = array<i64: 1, 8, 8, 4>}, {transform_indices = @transform_4, window_bounds = array<i64: 36, 4>}, {transform_indices = @transform_5, window_bounds = array<i64: 1, 4>}, {transform_indices = @transform_6, window_bounds = array<i64: 1, 8, 8, 4>}]} {
    %c0 = arith.constant 0 : index
    %c0_0 = arith.constant 0 : index
    %c0_1 = arith.constant 0 : index
    %c0_2 = arith.constant 0 : index
    %0 = vector.load %arg3[%c0, %c0_0, %c0_1, %c0_2] : memref<1x9x9x4xf32, #tpu.memory_space<vmem>>, vector<1x8x8x4xf32>
    %1 = vector.shape_cast %0 : vector<1x8x8x4xf32> to vector<8x8x4xf32>
    %c0_3 = arith.constant 0 : index
    %c0_4 = arith.constant 0 : index
    %c0_5 = arith.constant 0 : index
    %c0_6 = arith.constant 0 : index
    %2 = vector.load %arg4[%c0_3, %c0_4, %c0_5, %c0_6] : memref<1x9x8x4xf32, #tpu.memory_space<vmem>>, vector<1x8x8x4xf32>
    %3 = vector.shape_cast %2 : vector<1x8x8x4xf32> to vector<8x8x4xf32>
    %c0_7 = arith.constant 0 : index
    %c0_8 = arith.constant 0 : index
    %c1 = arith.constant 1 : index
    %c0_9 = arith.constant 0 : index
    %4 = vector.load %arg3[%c0_7, %c0_8, %c1, %c0_9] : memref<1x9x9x4xf32, #tpu.memory_space<vmem>>, vector<1x8x8x4xf32>
    %5 = vector.shape_cast %4 : vector<1x8x8x4xf32> to vector<8x8x4xf32>
    %c0_10 = arith.constant 0 : index
    %c0_11 = arith.constant 0 : index
    %c0_12 = arith.constant 0 : index
    %c0_13 = arith.constant 0 : index
    %6 = vector.load %arg5[%c0_10, %c0_11, %c0_12, %c0_13] : memref<1x8x9x4xf32, #tpu.memory_space<vmem>>, vector<1x8x8x4xf32>
    %7 = vector.shape_cast %6 : vector<1x8x8x4xf32> to vector<8x8x4xf32>
    %c0_14 = arith.constant 0 : index
    %c0_15 = arith.constant 0 : index
    %c0_16 = arith.constant 0 : index
    %c0_17 = arith.constant 0 : index
    %8 = vector.load %arg6[%c0_14, %c0_15, %c0_16, %c0_17] : memref<1x8x8x4xf32, #tpu.memory_space<vmem>>, vector<1x8x8x4xf32>
    %9 = vector.shape_cast %8 : vector<1x8x8x4xf32> to vector<8x8x4xf32>
    %c0_18 = arith.constant 0 : index
    %c0_19 = arith.constant 0 : index
    %c1_20 = arith.constant 1 : index
    %c0_21 = arith.constant 0 : index
    %10 = vector.load %arg5[%c0_18, %c0_19, %c1_20, %c0_21] : memref<1x8x9x4xf32, #tpu.memory_space<vmem>>, vector<1x8x8x4xf32>
    %11 = vector.shape_cast %10 : vector<1x8x8x4xf32> to vector<8x8x4xf32>
    %c0_22 = arith.constant 0 : index
    %c1_23 = arith.constant 1 : index
    %c0_24 = arith.constant 0 : index
    %c0_25 = arith.constant 0 : index
    %12 = vector.load %arg3[%c0_22, %c1_23, %c0_24, %c0_25] : memref<1x9x9x4xf32, #tpu.memory_space<vmem>>, vector<1x8x8x4xf32>
    %13 = vector.shape_cast %12 : vector<1x8x8x4xf32> to vector<8x8x4xf32>
    %c0_26 = arith.constant 0 : index
    %c1_27 = arith.constant 1 : index
    %c0_28 = arith.constant 0 : index
    %c0_29 = arith.constant 0 : index
    %14 = vector.load %arg4[%c0_26, %c1_27, %c0_28, %c0_29] : memref<1x9x8x4xf32, #tpu.memory_space<vmem>>, vector<1x8x8x4xf32>
    %15 = vector.shape_cast %14 : vector<1x8x8x4xf32> to vector<8x8x4xf32>
    %c0_30 = arith.constant 0 : index
    %c1_31 = arith.constant 1 : index
    %c1_32 = arith.constant 1 : index
    %c0_33 = arith.constant 0 : index
    %16 = vector.load %arg3[%c0_30, %c1_31, %c1_32, %c0_33] : memref<1x9x9x4xf32, #tpu.memory_space<vmem>>, vector<1x8x8x4xf32>
    %17 = vector.shape_cast %16 : vector<1x8x8x4xf32> to vector<8x8x4xf32>
    %18 = vector.shape_cast %1 : vector<8x8x4xf32> to vector<64x4xf32>
    %19 = vector.shape_cast %3 : vector<8x8x4xf32> to vector<64x4xf32>
    %20 = vector.shape_cast %5 : vector<8x8x4xf32> to vector<64x4xf32>
    %21 = vector.shape_cast %7 : vector<8x8x4xf32> to vector<64x4xf32>
    %22 = vector.shape_cast %9 : vector<8x8x4xf32> to vector<64x4xf32>
    %23 = vector.shape_cast %11 : vector<8x8x4xf32> to vector<64x4xf32>
    %24 = vector.shape_cast %13 : vector<8x8x4xf32> to vector<64x4xf32>
    %25 = vector.shape_cast %15 : vector<8x8x4xf32> to vector<64x4xf32>
    %26 = vector.shape_cast %17 : vector<8x8x4xf32> to vector<64x4xf32>
    %27 = tpu.concatenate %18, %19, %20, %21, %22, %23, %24, %25, %26 in 1 : vector<64x4xf32>, vector<64x4xf32>, vector<64x4xf32>, vector<64x4xf32>, vector<64x4xf32>, vector<64x4xf32>, vector<64x4xf32>, vector<64x4xf32>, vector<64x4xf32> -> vector<64x36xf32>
    %c0_34 = arith.constant 0 : index
    %c0_35 = arith.constant 0 : index
    %28 = vector.load %arg7[%c0_34, %c0_35] : memref<36x4xf32, #tpu.memory_space<vmem>>, vector<36x4xf32>
    %cst = arith.constant dense<0.000000e+00> : vector<64x4xf32>
    %29 = tpu.matmul %27, %28, %cst {dimension_numbers = #tpu.dot_dimension_numbers<[1], [0], [0], [1], [0, 0, 1, 1], [], []>} : vector<64x36xf32>, vector<36x4xf32>, vector<64x4xf32> -> vector<64x4xf32>
    %c0_36 = arith.constant 0 : index
    %c0_37 = arith.constant 0 : index
    %30 = vector.load %arg8[%c0_36, %c0_37] : memref<1x4xf32, #tpu.memory_space<vmem>>, vector<1x4xf32>
    %31 = vector.broadcast %30 : vector<1x4xf32> to vector<64x4xf32>
    %32 = arith.addf %29, %31 : vector<64x4xf32>
    %33 = vector.shape_cast %32 : vector<64x4xf32> to vector<8x8x4xf32>
    %c0_38 = arith.constant 0 : index
    %c0_39 = arith.constant 0 : index
    %c0_40 = arith.constant 0 : index
    %c0_41 = arith.constant 0 : index
    %34 = vector.load %arg9[%c0_38, %c0_39, %c0_40, %c0_41] : memref<1x8x8x4xf32, #tpu.memory_space<vmem>>, vector<1x8x8x4xf32>
    %35 = vector.shape_cast %34 : vector<1x8x8x4xf32> to vector<8x8x4xf32>
    %36 = vector.shape_cast %33 : vector<8x8x4xf32> to vector<1x8x8x4xf32>
    tpu.vector_store %arg9[%c0_38, %c0_39, %c0_40, %c0_41], %36 {strides = array<i32>} : memref<1x8x8x4xf32, #tpu.memory_space<vmem>>, vector<1x8x8x4xf32>,
    return
  }
  func.func @transform_0(%arg0: i32, %arg1: i32, %arg2: i32) -> (i32, i32, i32, i32) {
    %c1_i32 = arith.constant 1 : i32
    %0 = arith.muli %arg0, %c1_i32 : i32
    %1 = arith.addi %0, %arg1 : i32
    %c0_i32 = arith.constant 0 : i32
    %c0_i32_0 = arith.constant 0 : i32
    %c0_i32_1 = arith.constant 0 : i32
    %c0_i32_2 = arith.constant 0 : i32
    return %1, %c0_i32, %c0_i32_0, %c0_i32_1 : i32, i32, i32, i32
  }
  func.func @transform_1(%arg0: i32, %arg1: i32, %arg2: i32) -> (i32, i32, i32, i32) {
    %c1_i32 = arith.constant 1 : i32
    %0 = arith.muli %arg0, %c1_i32 : i32
    %1 = arith.addi %0, %arg1 : i32
    %c0_i32 = arith.constant 0 : i32
    %c0_i32_0 = arith.constant 0 : i32
    %c0_i32_1 = arith.constant 0 : i32
    %c0_i32_2 = arith.constant 0 : i32
    return %1, %c0_i32, %c0_i32_0, %c0_i32_1 : i32, i32, i32, i32
  }
  func.func @transform_2(%arg0: i32, %arg1: i32, %arg2: i32) -> (i32, i32, i32, i32) {
    %c0_i32 = arith.constant 0 : i32
    %c0_i32_0 = arith.constant 0 : i32
    %c0_i32_1 = arith.constant 0 : i32
    return %arg0, %arg1, %c0_i32, %c0_i32_0 : i32, i32, i32, i32
  }
  func.func @transform_3(%arg0: i32, %arg1: i32, %arg2: i32) -> (i32, i32, i32, i32) {
    %c0_i32 = arith.constant 0 : i32
    %c0_i32_0 = arith.constant 0 : i32
    %c0_i32_1 = arith.constant 0 : i32
    return %arg0, %arg1, %c0_i32, %c0_i32_0 : i32, i32, i32, i32
  }
  func.func @transform_4(%arg0: i32, %arg1: i32, %arg2: i32) -> (i32, i32) {
    %c0_i32 = arith.constant 0 : i32
    %c0_i32_0 = arith.constant 0 : i32
    return %c0_i32, %arg2 : i32, i32
  }
  func.func @transform_5(%arg0: i32, %arg1: i32, %arg2: i32) -> (i32, i32) {
    %c0_i32 = arith.constant 0 : i32
    %c0_i32_0 = arith.constant 0 : i32
    return %c0_i32, %arg2 : i32, i32
  }
  func.func @transform_6(%arg0: i32, %arg1: i32, %arg2: i32) -> (i32, i32, i32, i32) {
    %c0_i32 = arith.constant 0 : i32
    %c0_i32_0 = arith.constant 0 : i32
    return %arg0, %arg1, %c0_i32, %arg2 : i32, i32, i32, i32
  }
}

</mosaic_0001>

<llo_original>
// kernel: downsample.1
$region0: #{downsample.1}
  #allocation0 [shape = 'u32[]', space=smem, size = 0x4, offset = 0x4, fixed_abs, tag = 'smem constant byte address 0x4 - core index']
  #allocation1 [shape = 'u32[72,128]{1,0:T(1,128)}', space=vmem, size = 0x9000, scoped, tag = 'internal scratch']
  %s0 = inlined_call_operand.vmem [shape: f32[2,9,9,4], index: 0, kind: input, shape index: {}]
  %s1 = inlined_call_operand.vmem [shape: f32[2,9,8,4], index: 1, kind: input, shape index: {}]
  %s2 = inlined_call_operand.vmem [shape: f32[2,8,9,4], index: 2, kind: input, shape index: {}]
  %s3 = inlined_call_operand.vmem [shape: f32[2,8,8,4], index: 3, kind: input, shape index: {}]
  %s4 = inlined_call_operand.vmem [shape: f32[36,4], index: 4, kind: input, shape index: {}]
  %s5 = inlined_call_operand.vmem [shape: f32[1,4], index: 5, kind: input, shape index: {}]
  %s6 = inlined_call_operand.vmem [shape: f32[2,8,8,4], index: 6, kind: output, shape index: {}]
  %s7 = sld [smem:[#allocation0]]
  $region57: #{downsample.1} parent=0
    _
  %s9 = ssub.s32 1, %s7
  %s10 = scalar_select 0, %s9, %s7
  loop: start=0, step=1, limit=4
  $region2: #{downsample.1} parent=0 // loop_pre_header
    _
  $region3: #{downsample.1} parent=0 // loop_header
    %s12 = sphi 0, %s16
    %p13 = scmp.ge.s32.totalorder %s12, 4
    %s19 = sphi 0, %s38
    %s20 = sphi 0, %s34
    %s21 = sphi 0, %s30
    %s22 = sphi 0, %s19
    %s23 = sphi 0, %s20
    %s24 = sphi 0, %s21
    %s25 = sphi 0, %s22
    %s26 = sphi 0, %s23
    %s27 = sphi 0, %s24
    %s43 = sphi 0, %s45
    %s46 = sphi 0, %s43
    %s47 = sphi 0, %s46
    %s63 = sphi 0, %s47
    %s71 = sphi 0, %s73
    %s74 = sphi 0, %s71
    %s75 = sphi 0, %s74
    %s91 = sphi 0, %s75
    %s99 = sphi 0, %s101
    %s102 = sphi 0, %s99
    %s103 = sphi 0, %s102
    %s119 = sphi 0, %s103
    %s127 = sphi 0, %s129
    %s130 = sphi 0, %s127
    %s131 = sphi 0, %s130
    %s147 = sphi 0, %s131
    %s153 = sphi 0, %s155
    %s156 = sphi 0, %s153
    %s157 = sphi 0, %s156
    %s173 = sphi 0, %s157
    %s179 = sphi 0, %s181
    %s182 = sphi 0, %s179
    %s183 = sphi 0, %s182
    %s199 = sphi 0, %s183
    %s209 = sphi 0, %s211
    %s212 = sphi 0, %s209
    %s213 = sphi 0, %s212
    %s229 = sphi 0, %s213
  $region4: #{downsample.1} parent=0 // loop_header_branch
    %15 = sbr.rel (%p13) target = $region8
  $region5: #{downsample.1} parent=0 // loop_body
    %s17 = ssub.s32 %s12, 1
    %s18 = ssub.s32 %s12, 2
    %s28 = sadd.s32 1, %s21
    %p29 = scmp.ge.s32.totalorder %s28, 1
    %s30 = scalar_select %p29, 0, %s28
    %s31 = sadd.s32 1, %s20
    %s32 = scalar_select %p29, %s31, %s20
    %p33 = scmp.ge.s32.totalorder %s32, 1
    %s34 = scalar_select %p33, 0, %s32
    %s35 = sadd.s32 1, %s19
    %s36 = scalar_select %p33, %s35, %s19
    %p37 = scmp.ge.s32.totalorder %s36, 2
    %s38 = scalar_select %p37, 0, %s36
    %s39 = sadd.s32 %s19, %s20
    %s40 = sadd.s32 %s38, %s34
    %s41 = ssub.s32 %s39, %s40
    %p42 = scmp.eq.s32.totalorder %s41, 0
    %s44 = sadd.s32 %s43, 1
    %s45 = scalar_select %p42, %s43, %s44
    %p48 = pneg %p42
    %p49 = scmp.eq.s32.totalorder %s12, 1
    %p50 = por %p48, %p49
    %p51 = scmp.ne.s32.totalorder %s43, %s46
    %p52 = scmp.eq.s32.totalorder %s12, 0
    %p53 = por %p51, %p52
    %p54 = scmp.ne.s32.totalorder %s43, %s46
    %p55 = scmp.eq.s32.totalorder %s17, 1
    %p56 = por %p54, %p55
    %p57 = scmp.ne.s32.totalorder %s46, %s47
    %p58 = scmp.eq.s32.totalorder %s17, 0
    %p59 = por %p57, %p58
    %p60 = scmp.ne.s32.totalorder %s46, %s47
    %p61 = scmp.eq.s32.totalorder %s18, 1
    %p62 = por %p60, %p61
    %p64 = scmp.ne.s32.totalorder %s47, %s63
    %p65 = scmp.eq.s32.totalorder %s18, 0
    %p66 = por %p64, %p65
    %s67 = sadd.s32 %s19, %s20
    %s68 = sadd.s32 %s38, %s34
    %s69 = ssub.s32 %s67, %s68
    %p70 = scmp.eq.s32.totalorder %s69, 0
    %s72 = sadd.s32 %s71, 1
    %s73 = scalar_select %p70, %s71, %s72
    %p76 = pneg %p70
    %p77 = scmp.eq.s32.totalorder %s12, 1
    %p78 = por %p76, %p77
    %p79 = scmp.ne.s32.totalorder %s71, %s74
    %p80 = scmp.eq.s32.totalorder %s12, 0
    %p81 = por %p79, %p80
    %p82 = scmp.ne.s32.totalorder %s71, %s74
    %p83 = scmp.eq.s32.totalorder %s17, 1
    %p84 = por %p82, %p83
    %p85 = scmp.ne.s32.totalorder %s74, %s75
    %p86 = scmp.eq.s32.totalorder %s17, 0
    %p87 = por %p85, %p86
    %p88 = scmp.ne.s32.totalorder %s74, %s75
    %p89 = scmp.eq.s32.totalorder %s18, 1
    %p90 = por %p88, %p89
    %p92 = scmp.ne.s32.totalorder %s75, %s91
    %p93 = scmp.eq.s32.totalorder %s18, 0
    %p94 = por %p92, %p93
    %s95 = ssub.s32 %s19, %s38
    %s96 = ssub.s32 %s20, %s34
    %s97 = sor.u32 %s95, %s96
    %p98 = scmp.eq.s32.totalorder %s97, 0
    %s100 = sadd.s32 %s99, 1
    %s101 = scalar_select %p98, %s99, %s100
    %p104 = pneg %p98
    %p105 = scmp.eq.s32.totalorder %s12, 1
    %p106 = por %p104, %p105
    %p107 = scmp.ne.s32.totalorder %s99, %s102
    %p108 = scmp.eq.s32.totalorder %s12, 0
    %p109 = por %p107, %p108
    %p110 = scmp.ne.s32.totalorder %s99, %s102
    %p111 = scmp.eq.s32.totalorder %s17, 1
    %p112 = por %p110, %p111
    %p113 = scmp.ne.s32.totalorder %s102, %s103
    %p114 = scmp.eq.s32.totalorder %s17, 0
    %p115 = por %p113, %p114
    %p116 = scmp.ne.s32.totalorder %s102, %s103
    %p117 = scmp.eq.s32.totalorder %s18, 1
    %p118 = por %p116, %p117
    %p120 = scmp.ne.s32.totalorder %s103, %s119
    %p121 = scmp.eq.s32.totalorder %s18, 0
    %p122 = por %p120, %p121
    %s123 = ssub.s32 %s19, %s38
    %s124 = ssub.s32 %s20, %s34
    %s125 = sor.u32 %s123, %s124
    %p126 = scmp.eq.s32.totalorder %s125, 0
    %s128 = sadd.s32 %s127, 1
    %s129 = scalar_select %p126, %s127, %s128
    %p132 = pneg %p126
    %p133 = scmp.eq.s32.totalorder %s12, 1
    %p134 = por %p132, %p133
    %p135 = scmp.ne.s32.totalorder %s127, %s130
    %p136 = scmp.eq.s32.totalorder %s12, 0
    %p137 = por %p135, %p136
    %p138 = scmp.ne.s32.totalorder %s127, %s130
    %p139 = scmp.eq.s32.totalorder %s17, 1
    %p140 = por %p138, %p139
    %p141 = scmp.ne.s32.totalorder %s130, %s131
    %p142 = scmp.eq.s32.totalorder %s17, 0
    %p143 = por %p141, %p142
    %p144 = scmp.ne.s32.totalorder %s130, %s131
    %p145 = scmp.eq.s32.totalorder %s18, 1
    %p146 = por %p144, %p145
    %p148 = scmp.ne.s32.totalorder %s131, %s147
    %p149 = scmp.eq.s32.totalorder %s18, 0
    %p150 = por %p148, %p149
    %s151 = ssub.s32 %s21, %s30
    %p152 = scmp.eq.s32.totalorder %s151, 0
    %s154 = sadd.s32 %s153, 1
    %s155 = scalar_select %p152, %s153, %s154
    %p158 = pneg %p152
    %p159 = scmp.eq.s32.totalorder %s12, 1
    %p160 = por %p158, %p159
    %p161 = scmp.ne.s32.totalorder %s153, %s156
    %p162 = scmp.eq.s32.totalorder %s12, 0
    %p163 = por %p161, %p162
    %p164 = scmp.ne.s32.totalorder %s153, %s156
    %p165 = scmp.eq.s32.totalorder %s17, 1
    %p166 = por %p164, %p165
    %p167 = scmp.ne.s32.totalorder %s156, %s157
    %p168 = scmp.eq.s32.totalorder %s17, 0
    %p169 = por %p167, %p168
    %p170 = scmp.ne.s32.totalorder %s156, %s157
    %p171 = scmp.eq.s32.totalorder %s18, 1
    %p172 = por %p170, %p171
    %p174 = scmp.ne.s32.totalorder %s157, %s173
    %p175 = scmp.eq.s32.totalorder %s18, 0
    %p176 = por %p174, %p175
    %s177 = ssub.s32 %s21, %s30
    %p178 = scmp.eq.s32.totalorder %s177, 0
    %s180 = sadd.s32 %s179, 1
    %s181 = scalar_select %p178, %s179, %s180
    %p184 = pneg %p178
    %p185 = scmp.eq.s32.totalorder %s12, 1
    %p186 = por %p184, %p185
    %p187 = scmp.ne.s32.totalorder %s179, %s182
    %p188 = scmp.eq.s32.totalorder %s12, 0
    %p189 = por %p187, %p188
    %p190 = scmp.ne.s32.totalorder %s179, %s182
    %p191 = scmp.eq.s32.totalorder %s17, 1
    %p192 = por %p190, %p191
    %p193 = scmp.ne.s32.totalorder %s182, %s183
    %p194 = scmp.eq.s32.totalorder %s17, 0
    %p195 = por %p193, %p194
    %p196 = scmp.ne.s32.totalorder %s182, %s183
    %p197 = scmp.eq.s32.totalorder %s18, 1
    %p198 = por %p196, %p197
    %p200 = scmp.ne.s32.totalorder %s183, %s199
    %p201 = scmp.eq.s32.totalorder %s18, 0
    %p202 = por %p200, %p201
    %s203 = ssub.s32 %s19, %s38
    %s204 = ssub.s32 %s20, %s34
    %s205 = sor.u32 %s203, %s204
    %s206 = ssub.s32 %s21, %s30
    %s207 = sor.u32 %s205, %s206
    %p208 = scmp.eq.s32.totalorder %s207, 0
    %s210 = sadd.s32 %s209, 1
    %s211 = scalar_select %p208, %s209, %s210
    %p214 = pneg %p208
    %p215 = scmp.eq.s32.totalorder %s12, 1
    %p216 = por %p214, %p215
    %p217 = scmp.ne.s32.totalorder %s209, %s212
    %p218 = scmp.eq.s32.totalorder %s12, 0
    %p219 = por %p217, %p218
    %p220 = scmp.ne.s32.totalorder %s209, %s212
    %p221 = scmp.eq.s32.totalorder %s17, 1
    %p222 = por %p220, %p221
    %p223 = scmp.ne.s32.totalorder %s212, %s213
    %p224 = scmp.eq.s32.totalorder %s17, 0
    %p225 = por %p223, %p224
    %p226 = scmp.ne.s32.totalorder %s212, %s213
    %p227 = scmp.eq.s32.totalorder %s18, 1
    %p228 = por %p226, %p227
    %p230 = scmp.ne.s32.totalorder %s213, %s229
    %p231 = scmp.eq.s32.totalorder %s18, 0
    %p232 = por %p230, %p231
    %p233 = scmp.le.s32.totalorder 1, %s12
    %p234 = scmp.lt.s32.totalorder %s12, 3
    %p235 = pnand %p233, %p234
    %p236 = pneg %p235
    // Predicated region
    $region9: #{downsample.1} parent=5 // pred_check
      _
    $region10: #{downsample.1} parent=5 // pred_check_branch
      %238 = sbr.rel (%p235) target = $region12
    $region11: #{downsample.1} parent=5 // pred_region
      %s239 = ssub.s32 %s12, 1
      // Predicated region
      $region13: #{downsample.1} parent=11 // pred_check
        %p240 = pneg %p169
      $region14: #{downsample.1} parent=11 // pred_check_branch
        %242 = sbr.rel (%p240) target = $region16
      $region15: #{downsample.1} parent=11 // pred_region
        %p243 = scmp.lt.s32.totalorder %s24, 0
        %s244 = scalar_select %p243, %s24, 0
        %s245 = smul.addr %s244, 8
        %s246 = scalar_lea.vmem %s4, %s245
      $region16: #{downsample.1} parent=11 // pred_fallthru
        _
      // Predicated region
      $region17: #{downsample.1} parent=11 // pred_check
        %p247 = pneg %p195
      $region18: #{downsample.1} parent=11 // pred_check_branch
        %249 = sbr.rel (%p247) target = $region20
      $region19: #{downsample.1} parent=11 // pred_region
        %p250 = scmp.lt.s32.totalorder %s24, 0
        %s251 = scalar_select %p250, %s24, 0
        %s252 = scalar_lea.vmem %s5, %s251
      $region20: #{downsample.1} parent=11 // pred_fallthru
        _
    $region12: #{downsample.1} parent=5 // pred_fallthru
      _
    %p253 = scmp.lt.s32.totalorder %s12, 2
    // Predicated region
    $region21: #{downsample.1} parent=5 // pred_check
      %p254 = pneg %p253
    $region22: #{downsample.1} parent=5 // pred_check_branch
      %256 = sbr.rel (%p254) target = $region24
    $region23: #{downsample.1} parent=5 // pred_region
      // Predicated region
      $region25: #{downsample.1} parent=23 // pred_check
        %p257 = pneg %p53
      $region26: #{downsample.1} parent=23 // pred_check_branch
        %259 = sbr.rel (%p257) target = $region28
      $region27: #{downsample.1} parent=23 // pred_region
        %s260 = sadd.s32 %s19, %s20
        %p261 = scmp.lt.s32.totalorder %s260, 1
        %s262 = scalar_select %p261, %s260, 1
        %s263 = smul.addr %s262, 18
        %s264 = smul.addr %s263, 8
        %s265 = scalar_lea.vmem %s0, %s264
        %s266 = sadd.s32 %s19, %s20
      $region28: #{downsample.1} parent=23 // pred_fallthru
        _
      // Predicated region
      $region29: #{downsample.1} parent=23 // pred_check
        %p267 = pneg %p81
      $region30: #{downsample.1} parent=23 // pred_check_branch
        %269 = sbr.rel (%p267) target = $region32
      $region31: #{downsample.1} parent=23 // pred_region
        %s270 = sadd.s32 %s19, %s20
        %p271 = scmp.lt.s32.totalorder %s270, 1
        %s272 = scalar_select %p271, %s270, 1
        %s273 = smul.addr %s272, 9
        %s274 = smul.addr %s273, 8
        %s275 = scalar_lea.vmem %s1, %s274
        %s276 = sadd.s32 %s19, %s20
      $region32: #{downsample.1} parent=23 // pred_fallthru
        _
      // Predicated region
      $region33: #{downsample.1} parent=23 // pred_check
        %p277 = pneg %p109
      $region34: #{downsample.1} parent=23 // pred_check_branch
        %279 = sbr.rel (%p277) target = $region36
      $region35: #{downsample.1} parent=23 // pred_region
        %s280 = smul.u32 8, %s20
        %p281 = scmp.lt.s32.totalorder %s19, 1
        %s282 = scalar_select %p281, %s19, 1
        %p283 = scmp.lt.s32.totalorder %s280, 7
        %s284 = scalar_select %p283, %s280, 7
        %s285 = smul.addr %s284, 2
        %s286 = smul.addr %s282, 16
        %s287 = sadd.s32 %s285, %s286
        %s288 = smul.addr %s287, 8
        %s289 = scalar_lea.vmem %s2, %s288
        %s290 = smul.u32 8, %s20
      $region36: #{downsample.1} parent=23 // pred_fallthru
        _
      // Predicated region
      $region37: #{downsample.1} parent=23 // pred_check
        %p291 = pneg %p137
      $region38: #{downsample.1} parent=23 // pred_check_branch
        %293 = sbr.rel (%p291) target = $region40
      $region39: #{downsample.1} parent=23 // pred_region
        %s294 = smul.u32 8, %s20
        %p295 = scmp.lt.s32.totalorder %s19, 1
        %s296 = scalar_select %p295, %s19, 1
        %p297 = scmp.lt.s32.totalorder %s294, 7
        %s298 = scalar_select %p297, %s294, 7
        %s299 = smul.addr %s296, 8
        %s300 = sadd.s32 %s298, %s299
        %s301 = smul.addr %s300, 8
        %s302 = scalar_lea.vmem %s3, %s301
        %s303 = smul.u32 8, %s20
      $region40: #{downsample.1} parent=23 // pred_fallthru
        _
    $region24: #{downsample.1} parent=5 // pred_fallthru
      _
    %p304 = scmp.le.s32.totalorder 1, %s12
    %p305 = scmp.lt.s32.totalorder %s12, 3
    %p306 = pnand %p304, %p305
    %p307 = pneg %p306
    // Predicated region
    $region41: #{downsample.1} parent=5 // pred_check
      _
    $region42: #{downsample.1} parent=5 // pred_check_branch
      %309 = sbr.rel (%p306) target = $region44
    $region43: #{downsample.1} parent=5 // pred_region
      %s310 = ssub.s32 %s12, 1
      %s311 = sadd.s32 %s22, %s23
      %p312 = scmp.lt.s32.totalorder %s311, 1
      %s313 = scalar_select %p312, %s311, 1
      %s314 = smul.addr %s313, 18
      %s315 = smul.addr %s314, 8
      %s316 = scalar_lea.vmem %s0, %s315
      %p317 = pneg %p59
      %p318 = pneg %p56
      %s319 = sadd.s32 %s22, %s23
      %p320 = scmp.lt.s32.totalorder %s319, 1
      %s321 = scalar_select %p320, %s319, 1
      %s322 = smul.addr %s321, 9
      %s323 = smul.addr %s322, 8
      %s324 = scalar_lea.vmem %s1, %s323
      %p325 = pneg %p87
      %p326 = pneg %p84
      %s327 = smul.u32 8, %s23
      %p328 = scmp.lt.s32.totalorder %s22, 1
      %s329 = scalar_select %p328, %s22, 1
      %p330 = scmp.lt.s32.totalorder %s327, 7
      %s331 = scalar_select %p330, %s327, 7
      %s332 = smul.addr %s331, 2
      %s333 = smul.addr %s329, 16
      %s334 = sadd.s32 %s332, %s333
      %s335 = smul.addr %s334, 8
      %s336 = scalar_lea.vmem %s2, %s335
      %p337 = pneg %p115
      %p338 = pneg %p112
      %s339 = smul.u32 8, %s23
      %p340 = scmp.lt.s32.totalorder %s22, 1
      %s341 = scalar_select %p340, %s22, 1
      %p342 = scmp.lt.s32.totalorder %s339, 7
      %s343 = scalar_select %p342, %s339, 7
      %s344 = smul.addr %s341, 8
      %s345 = sadd.s32 %s343, %s344
      %s346 = smul.addr %s345, 8
      %s347 = scalar_lea.vmem %s3, %s346
      %p348 = pneg %p143
      %p349 = pneg %p140
      %p350 = scmp.lt.s32.totalorder %s24, 0
      %s351 = scalar_select %p350, %s24, 0
      %s352 = smul.addr %s351, 8
      %s353 = scalar_lea.vmem %s4, %s352
      %p354 = pneg %p169
      %p355 = pneg %p166
      %p356 = scmp.lt.s32.totalorder %s24, 0
      %s357 = scalar_select %p356, %s24, 0
      %s358 = scalar_lea.vmem %s5, %s357
      %p359 = pneg %p195
      %p360 = pneg %p192
      %p361 = pneg %p225
      %p362 = pneg %p222
      %s363 = smul.u32 8, %s23
      %p364 = scmp.lt.s32.totalorder %s22, 1
      %s365 = scalar_select %p364, %s22, 1
      %p366 = scmp.lt.s32.totalorder %s363, 7
      %s367 = scalar_select %p366, %s363, 7
      %p368 = scmp.lt.s32.totalorder %s24, 0
      %s369 = scalar_select %p368, %s24, 0
      %s370 = sadd.s32 %s369, %s367
      %s371 = smul.addr %s365, 8
      %s372 = sadd.s32 %s370, %s371
      %s373 = smul.addr %s372, 8
      %s374 = scalar_lea.vmem %s6, %s373
      %s375 = sadd.s32 %s22, %s23
      %p376 = scmp.lt.s32.totalorder %s375, 1
      %s377 = scalar_select %p376, %s375, 1
      %s378 = smul.addr %s377, 18
      %s379 = smul.addr %s378, 8
      %s380 = scalar_lea.vmem %s0, %s379
      %s381 = sadd.s32 %s22, %s23
      %s382 = sadd.s32 %s22, %s23
      %p383 = scmp.lt.s32.totalorder %s382, 1
      %s384 = scalar_select %p383, %s382, 1
      %s385 = smul.addr %s384, 9
      %s386 = smul.addr %s385, 8
      %s387 = scalar_lea.vmem %s1, %s386
      %s388 = sadd.s32 %s22, %s23
      %s389 = smul.u32 8, %s23
      %p390 = scmp.lt.s32.totalorder %s22, 1
      %s391 = scalar_select %p390, %s22, 1
      %p392 = scmp.lt.s32.totalorder %s389, 7
      %s393 = scalar_select %p392, %s389, 7
      %s394 = smul.addr %s393, 2
      %s395 = smul.addr %s391, 16
      %s396 = sadd.s32 %s394, %s395
      %s397 = smul.addr %s396, 8
      %s398 = scalar_lea.vmem %s2, %s397
      %s399 = smul.u32 8, %s23
      %s400 = smul.u32 8, %s23
      %p401 = scmp.lt.s32.totalorder %s22, 1
      %s402 = scalar_select %p401, %s22, 1
      %p403 = scmp.lt.s32.totalorder %s400, 7
      %s404 = scalar_select %p403, %s400, 7
      %s405 = smul.addr %s402, 8
      %s406 = sadd.s32 %s404, %s405
      %s407 = smul.addr %s406, 8
      %s408 = scalar_lea.vmem %s3, %s407
      %s409 = smul.u32 8, %s23
      %p410 = scmp.lt.s32.totalorder %s24, 0
      %s411 = scalar_select %p410, %s24, 0
      %s412 = smul.addr %s411, 8
      %s413 = scalar_lea.vmem %s4, %s412
      %p414 = scmp.lt.s32.totalorder %s24, 0
      %s415 = scalar_select %p414, %s24, 0
      %s416 = scalar_lea.vmem %s5, %s415
      %s417 = smul.u32 8, %s23
      %p418 = scmp.lt.s32.totalorder %s22, 1
      %s419 = scalar_select %p418, %s22, 1
      %p420 = scmp.lt.s32.totalorder %s417, 7
      %s421 = scalar_select %p420, %s417, 7
      %p422 = scmp.lt.s32.totalorder %s24, 0
      %s423 = scalar_select %p422, %s24, 0
      %s424 = sadd.s32 %s423, %s421
      %s425 = smul.addr %s419, 8
      %s426 = sadd.s32 %s424, %s425
      %s427 = smul.addr %s426, 8
      %s428 = scalar_lea.vmem %s6, %s427
      %s429 = smul.u32 8, %s23
      %v430 = vld [vmem:[%s380] sm:$0xff]
      %v431 = vld [vmem:[%s380 + $0x10] sm:$0xff]
      %v432 = vld [vmem:[%s380 + $0x20] sm:$0xff]
      %v433 = vld [vmem:[%s380 + $0x30] sm:$0xff]
      %v434 = vld [vmem:[%s380 + $0x40] sm:$0xff]
      %v435 = vld [vmem:[%s380 + $0x50] sm:$0xff]
      %v436 = vld [vmem:[%s380 + $0x60] sm:$0xff]
      %v437 = vld [vmem:[%s380 + $0x70] sm:$0xff]
      %v438 = vld [vmem:[%s387] sm:$0xff]
      %v439 = vld [vmem:[%s387 + $0x8] sm:$0xff]
      %v440 = vld [vmem:[%s387 + $0x10] sm:$0xff]
      %v441 = vld [vmem:[%s387 + $0x18] sm:$0xff]
      %v442 = vld [vmem:[%s387 + $0x20] sm:$0xff]
      %v443 = vld [vmem:[%s387 + $0x28] sm:$0xff]
      %v444 = vld [vmem:[%s387 + $0x30] sm:$0xff]
      %v445 = vld [vmem:[%s387 + $0x38] sm:$0xff]
      %v446 = vld [vmem:[%s380 + $0x1] sm:$0xff]
      %v447 = vld [vmem:[%s380 + $0x11] sm:$0xff]
      %v448 = vld [vmem:[%s380 + $0x21] sm:$0xff]
      %v449 = vld [vmem:[%s380 + $0x31] sm:$0xff]
      %v450 = vld [vmem:[%s380 + $0x41] sm:$0xff]
      %v451 = vld [vmem:[%s380 + $0x51] sm:$0xff]
      %v452 = vld [vmem:[%s380 + $0x61] sm:$0xff]
      %v453 = vld [vmem:[%s380 + $0x71] sm:$0xff]
      %v454 = vld [vmem:[%s398] sm:$0xff]
      %v455 = vld [vmem:[%s398 + $0x10] sm:$0xff]
      %v456 = vld [vmem:[%s398 + $0x20] sm:$0xff]
      %v457 = vld [vmem:[%s398 + $0x30] sm:$0xff]
      %v458 = vld [vmem:[%s398 + $0x40] sm:$0xff]
      %v459 = vld [vmem:[%s398 + $0x50] sm:$0xff]
      %v460 = vld [vmem:[%s398 + $0x60] sm:$0xff]
      %v461 = vld [vmem:[%s398 + $0x70] sm:$0xff]
      %v462 = vld [vmem:[%s408] sm:$0xff]
      %v463 = vld [vmem:[%s408 + $0x8] sm:$0xff]
      %v464 = vld [vmem:[%s408 + $0x10] sm:$0xff]
      %v465 = vld [vmem:[%s408 + $0x18] sm:$0xff]
      %v466 = vld [vmem:[%s408 + $0x20] sm:$0xff]
      %v467 = vld [vmem:[%s408 + $0x28] sm:$0xff]
      %v468 = vld [vmem:[%s408 + $0x30] sm:$0xff]
      %v469 = vld [vmem:[%s408 + $0x38] sm:$0xff]
      %v470 = vld [vmem:[%s398 + $0x1] sm:$0xff]
      %v471 = vld [vmem:[%s398 + $0x11] sm:$0xff]
      %v472 = vld [vmem:[%s398 + $0x21] sm:$0xff]
      %v473 = vld [vmem:[%s398 + $0x31] sm:$0xff]
      %v474 = vld [vmem:[%s398 + $0x41] sm:$0xff]
      %v475 = vld [vmem:[%s398 + $0x51] sm:$0xff]
      %v476 = vld [vmem:[%s398 + $0x61] sm:$0xff]
      %v477 = vld [vmem:[%s398 + $0x71] sm:$0xff]
      %s478 = scalar_lea.vmem %s380, 16
      %v479 = vld [vmem:[%s478] sm:$0xff]
      %v480 = vld [vmem:[%s478 + $0x10] sm:$0xff]
      %v481 = vld [vmem:[%s478 + $0x20] sm:$0xff]
      %v482 = vld [vmem:[%s478 + $0x30] sm:$0xff]
      %v483 = vld [vmem:[%s478 + $0x40] sm:$0xff]
      %v484 = vld [vmem:[%s478 + $0x50] sm:$0xff]
      %v485 = vld [vmem:[%s478 + $0x60] sm:$0xff]
      %v486 = vld [vmem:[%s478 + $0x70] sm:$0xff]
      %s487 = scalar_lea.vmem %s387, 8
      %v488 = vld [vmem:[%s487] sm:$0xff]
      %v489 = vld [vmem:[%s487 + $0x8] sm:$0xff]
      %v490 = vld [vmem:[%s487 + $0x10] sm:$0xff]
      %v491 = vld [vmem:[%s487 + $0x18] sm:$0xff]
      %v492 = vld [vmem:[%s487 + $0x20] sm:$0xff]
      %v493 = vld [vmem:[%s487 + $0x28] sm:$0xff]
      %v494 = vld [vmem:[%s487 + $0x30] sm:$0xff]
      %v495 = vld [vmem:[%s487 + $0x38] sm:$0xff]
      %v496 = vld [vmem:[%s478 + $0x1] sm:$0xff]
      %v497 = vld [vmem:[%s478 + $0x11] sm:$0xff]
      %v498 = vld [vmem:[%s478 + $0x21] sm:$0xff]
      %v499 = vld [vmem:[%s478 + $0x31] sm:$0xff]
      %v500 = vld [vmem:[%s478 + $0x41] sm:$0xff]
      %v501 = vld [vmem:[%s478 + $0x51] sm:$0xff]
      %v502 = vld [vmem:[%s478 + $0x61] sm:$0xff]
      %v503 = vld [vmem:[%s478 + $0x71] sm:$0xff]
      %512 = vrot.lane.b32.xlu0 %v438, 4
      %v513 = vpop.permute.xlu0 %512
      %514 = vrot.lane.b32.xlu0 %v439, 4
      %v515 = vpop.permute.xlu0 %514
      %516 = vrot.lane.b32.xlu0 %v440, 4
      %v517 = vpop.permute.xlu0 %516
      %518 = vrot.lane.b32.xlu0 %v441, 4
      %v519 = vpop.permute.xlu0 %518
      %520 = vrot.lane.b32.xlu0 %v442, 4
      %v521 = vpop.permute.xlu0 %520
      %522 = vrot.lane.b32.xlu0 %v443, 4
      %v523 = vpop.permute.xlu0 %522
      %524 = vrot.lane.b32.xlu0 %v444, 4
      %v525 = vpop.permute.xlu0 %524
      %526 = vrot.lane.b32.xlu0 %v445, 4
      %v527 = vpop.permute.xlu0 %526
      %544 = vrot.lane.b32.xlu0 %v446, 8
      %v545 = vpop.permute.xlu0 %544
      %546 = vrot.lane.b32.xlu0 %v447, 8
      %v547 = vpop.permute.xlu0 %546
      %548 = vrot.lane.b32.xlu0 %v448, 8
      %v549 = vpop.permute.xlu0 %548
      %550 = vrot.lane.b32.xlu0 %v449, 8
      %v551 = vpop.permute.xlu0 %550
      %552 = vrot.lane.b32.xlu0 %v450, 8
      %v553 = vpop.permute.xlu0 %552
      %554 = vrot.lane.b32.xlu0 %v451, 8
      %v555 = vpop.permute.xlu0 %554
      %556 = vrot.lane.b32.xlu0 %v452, 8
      %v557 = vpop.permute.xlu0 %556
      %558 = vrot.lane.b32.xlu0 %v453, 8
      %v559 = vpop.permute.xlu0 %558
      %576 = vrot.lane.b32.xlu0 %v454, 12
      %v577 = vpop.permute.xlu0 %576
      %578 = vrot.lane.b32.xlu0 %v455, 12
      %v579 = vpop.permute.xlu0 %578
      %580 = vrot.lane.b32.xlu0 %v456, 12
      %v581 = vpop.permute.xlu0 %580
      %582 = vrot.lane.b32.xlu0 %v457, 12
      %v583 = vpop.permute.xlu0 %582
      %584 = vrot.lane.b32.xlu0 %v458, 12
      %v585 = vpop.permute.xlu0 %584
      %586 = vrot.lane.b32.xlu0 %v459, 12
      %v587 = vpop.permute.xlu0 %586
      %588 = vrot.lane.b32.xlu0 %v460, 12
      %v589 = vpop.permute.xlu0 %588
      %590 = vrot.lane.b32.xlu0 %v461, 12
      %v591 = vpop.permute.xlu0 %590
      %608 = vrot.lane.b32.xlu0 %v462, 16
      %v609 = vpop.permute.xlu0 %608
      %610 = vrot.lane.b32.xlu0 %v463, 16
      %v611 = vpop.permute.xlu0 %610
      %612 = vrot.lane.b32.xlu0 %v464, 16
      %v613 = vpop.permute.xlu0 %612
      %614 = vrot.lane.b32.xlu0 %v465, 16
      %v615 = vpop.permute.xlu0 %614
      %616 = vrot.lane.b32.xlu0 %v466, 16
      %v617 = vpop.permute.xlu0 %616
      %618 = vrot.lane.b32.xlu0 %v467, 16
      %v619 = vpop.permute.xlu0 %618
      %620 = vrot.lane.b32.xlu0 %v468, 16
      %v621 = vpop.permute.xlu0 %620
      %622 = vrot.lane.b32.xlu0 %v469, 16
      %v623 = vpop.permute.xlu0 %622
      %640 = vrot.lane.b32.xlu0 %v470, 20
      %v641 = vpop.permute.xlu0 %640
      %642 = vrot.lane.b32.xlu0 %v471, 20
      %v643 = vpop.permute.xlu0 %642
      %644 = vrot.lane.b32.xlu0 %v472, 20
      %v645 = vpop.permute.xlu0 %644
      %646 = vrot.lane.b32.xlu0 %v473, 20
      %v647 = vpop.permute.xlu0 %646
      %648 = vrot.lane.b32.xlu0 %v474, 20
      %v649 = vpop.permute.xlu0 %648
      %650 = vrot.lane.b32.xlu0 %v475, 20
      %v651 = vpop.permute.xlu0 %650
      %652 = vrot.lane.b32.xlu0 %v476, 20
      %v653 = vpop.permute.xlu0 %652
      %654 = vrot.lane.b32.xlu0 %v477, 20
      %v655 = vpop.permute.xlu0 %654
      %672 = vrot.lane.b32.xlu0 %v479, 24
      %v673 = vpop.permute.xlu0 %672
      %674 = vrot.lane.b32.xlu0 %v480, 24
      %v675 = vpop.permute.xlu0 %674
      %676 = vrot.lane.b32.xlu0 %v481, 24
      %v677 = vpop.permute.xlu0 %676
      %678 = vrot.lane.b32.xlu0 %v482, 24
      %v679 = vpop.permute.xlu0 %678
      %680 = vrot.lane.b32.xlu0 %v483, 24
      %v681 = vpop.permute.xlu0 %680
      %682 = vrot.lane.b32.xlu0 %v484, 24
      %v683 = vpop.permute.xlu0 %682
      %684 = vrot.lane.b32.xlu0 %v485, 24
      %v685 = vpop.permute.xlu0 %684
      %686 = vrot.lane.b32.xlu0 %v486, 24
      %v687 = vpop.permute.xlu0 %686
      %704 = vrot.lane.b32.xlu0 %v488, 28
      %v705 = vpop.permute.xlu0 %704
      %706 = vrot.lane.b32.xlu0 %v489, 28
      %v707 = vpop.permute.xlu0 %706
      %708 = vrot.lane.b32.xlu0 %v490, 28
      %v709 = vpop.permute.xlu0 %708
      %710 = vrot.lane.b32.xlu0 %v491, 28
      %v711 = vpop.permute.xlu0 %710
      %712 = vrot.lane.b32.xlu0 %v492, 28
      %v713 = vpop.permute.xlu0 %712
      %714 = vrot.lane.b32.xlu0 %v493, 28
      %v715 = vpop.permute.xlu0 %714
      %716 = vrot.lane.b32.xlu0 %v494, 28
      %v717 = vpop.permute.xlu0 %716
      %718 = vrot.lane.b32.xlu0 %v495, 28
      %v719 = vpop.permute.xlu0 %718
      %736 = vrot.lane.b32.xlu0 %v496, 32
      %v737 = vpop.permute.xlu0 %736
      %738 = vrot.lane.b32.xlu0 %v497, 32
      %v739 = vpop.permute.xlu0 %738
      %740 = vrot.lane.b32.xlu0 %v498, 32
      %v741 = vpop.permute.xlu0 %740
      %742 = vrot.lane.b32.xlu0 %v499, 32
      %v743 = vpop.permute.xlu0 %742
      %744 = vrot.lane.b32.xlu0 %v500, 32
      %v745 = vpop.permute.xlu0 %744
      %746 = vrot.lane.b32.xlu0 %v501, 32
      %v747 = vpop.permute.xlu0 %746
      %748 = vrot.lane.b32.xlu0 %v502, 32
      %v749 = vpop.permute.xlu0 %748
      %750 = vrot.lane.b32.xlu0 %v503, 32
      %v751 = vpop.permute.xlu0 %750
      %vm760 = vcmask 31744
      %v761 = vsel %vm760, %v430, %v513
      %v762 = vsel %vm760, %v431, %v515
      %v763 = vsel %vm760, %v432, %v517
      %v764 = vsel %vm760, %v433, %v519
      %v765 = vsel %vm760, %v434, %v521
      %v766 = vsel %vm760, %v435, %v523
      %v767 = vsel %vm760, %v436, %v525
      %v768 = vsel %vm760, %v437, %v527
      %vm769 = vcmask 64512
      %v770 = vsel %vm769, %v761, %v545
      %v771 = vsel %vm769, %v762, %v547
      %v772 = vsel %vm769, %v763, %v549
      %v773 = vsel %vm769, %v764, %v551
      %v774 = vsel %vm769, %v765, %v553
      %v775 = vsel %vm769, %v766, %v555
      %v776 = vsel %vm769, %v767, %v557
      %v777 = vsel %vm769, %v768, %v559
      %vm778 = vcmask 97280
      %v779 = vsel %vm778, %v770, %v577
      %v780 = vsel %vm778, %v771, %v579
      %v781 = vsel %vm778, %v772, %v581
      %v782 = vsel %vm778, %v773, %v583
      %v783 = vsel %vm778, %v774, %v585
      %v784 = vsel %vm778, %v775, %v587
      %v785 = vsel %vm778, %v776, %v589
      %v786 = vsel %vm778, %v777, %v591
      %vm787 = vcmask 130048
      %v788 = vsel %vm787, %v779, %v609
      %v789 = vsel %vm787, %v780, %v611
      %v790 = vsel %vm787, %v781, %v613
      %v791 = vsel %vm787, %v782, %v615
      %v792 = vsel %vm787, %v783, %v617
      %v793 = vsel %vm787, %v784, %v619
      %v794 = vsel %vm787, %v785, %v621
      %v795 = vsel %vm787, %v786, %v623
      %vm796 = vcmask 162816
      %v797 = vsel %vm796, %v788, %v641
      %v798 = vsel %vm796, %v789, %v643
      %v799 = vsel %vm796, %v790, %v645
      %v800 = vsel %vm796, %v791, %v647
      %v801 = vsel %vm796, %v792, %v649
      %v802 = vsel %vm796, %v793, %v651
      %v803 = vsel %vm796, %v794, %v653
      %v804 = vsel %vm796, %v795, %v655
      %vm805 = vcmask 195584
      %v806 = vsel %vm805, %v797, %v673
      %v807 = vsel %vm805, %v798, %v675
      %v808 = vsel %vm805, %v799, %v677
      %v809 = vsel %vm805, %v800, %v679
      %v810 = vsel %vm805, %v801, %v681
      %v811 = vsel %vm805, %v802, %v683
      %v812 = vsel %vm805, %v803, %v685
      %v813 = vsel %vm805, %v804, %v687
      %vm814 = vcmask 228352
      %v815 = vsel %vm814, %v806, %v705
      %v816 = vsel %vm814, %v807, %v707
      %v817 = vsel %vm814, %v808, %v709
      %v818 = vsel %vm814, %v809, %v711
      %v819 = vsel %vm814, %v810, %v713
      %v820 = vsel %vm814, %v811, %v715
      %v821 = vsel %vm814, %v812, %v717
      %v822 = vsel %vm814, %v813, %v719
      %vm823 = vcmask 261120
      %v824 = vsel %vm823, %v815, %v737
      %v825 = vsel %vm823, %v816, %v739
      %v826 = vsel %vm823, %v817, %v741
      %v827 = vsel %vm823, %v818, %v743
      %v828 = vsel %vm823, %v819, %v745
      %v829 = vsel %vm823, %v820, %v747
      %v830 = vsel %vm823, %v821, %v749
      %v831 = vsel %vm823, %v822, %v751
      %v832 = vld [vmem:[%s413] sm:$0xff]
      %v833 = vld [vmem:[%s413 + $0x8] sm:$0xff]
      %v834 = vld [vmem:[%s413 + $0x10] sm:$0xff]
      %v835 = vld [vmem:[%s413 + $0x18] sm:$0xff]
      %v836 = vld [vmem:[%s413 + $0x20] sm:$0xf]
      %v837 = vld [vmem:[%s416] sm:$0x1]
      %v839 = vperm.slane %v837, 0
      %vm841 = vcmask 293888
      %v843 = vsel %vm841, %v824, 0
      %v846 = vsel %vm841, %v825, 0
      %v849 = vsel %vm841, %v826, 0
      %v852 = vsel %vm841, %v827, 0
      %v855 = vsel %vm841, %v828, 0
      %v858 = vsel %vm841, %v829, 0
      %v861 = vsel %vm841, %v830, 0
      %v864 = vsel %vm841, %v831, 0
      %vm866 = vcmask 1043456
      %v868 = vsel %vm866, %v836, 0
      %870 = vmatpush.msra.mxu0 0.0
      %871 = vmatpush.msra.mxu0 0.0
      %872 = vmatpush.msra.mxu0 0.0
      %873 = vmatpush.msra.mxu0 0.0
      %874 = vmatpush.msra.mxu0 0.0
      %875 = vmatpush.msra.mxu0 0.0
      %876 = vmatpush.msra.mxu0 0.0
      %877 = vmatpush.msra.mxu0 0.0
      %878 = vmatpush.msra.mxu0 0.0
      %879 = vmatpush.msra.mxu0 0.0
      %880 = vmatpush.msra.mxu0 0.0
      %881 = vmatpush.msra.mxu0 %v868
      %882 = vmatpush.msra.mxu0 %v835
      %883 = vmatpush.msra.mxu0 %v834
      %884 = vmatpush.msra.mxu0 %v833
      %885 = vmatpush.msra.mxu0 %v832
      %886 = vmatmul.f32.gmra.mxu0 %v843
      %v887 = vpop.f32.mrf.mxu0
      %v888 = vadd.f32 %v839, %v887
      %889 = vmatmul.f32.gmra.mxu0 %v846
      %v890 = vpop.f32.mrf.mxu0
      %v891 = vadd.f32 %v839, %v890
      %892 = vmatmul.f32.gmra.mxu0 %v849
      %v893 = vpop.f32.mrf.mxu0
      %v894 = vadd.f32 %v839, %v893
      %895 = vmatmul.f32.gmra.mxu0 %v852
      %v896 = vpop.f32.mrf.mxu0
      %v897 = vadd.f32 %v839, %v896
      %898 = vmatmul.f32.gmra.mxu0 %v855
      %v899 = vpop.f32.mrf.mxu0
      %v900 = vadd.f32 %v839, %v899
      %901 = vmatmul.f32.gmra.mxu0 %v858
      %v902 = vpop.f32.mrf.mxu0
      %v903 = vadd.f32 %v839, %v902
      %904 = vmatmul.f32.gmra.mxu0 %v861
      %v905 = vpop.f32.mrf.mxu0
      %v906 = vadd.f32 %v839, %v905
      %907 = vmatmul.f32.gmra.mxu0 %v864
      %v908 = vpop.f32.mrf.mxu0
      %v909 = vadd.f32 %v839, %v908
      %910 = vdwg.mxu0
      %911 = vst.msk [vmem:[%s428] sm:$0xff] %vm760, %v888
      %912 = vst.msk [vmem:[%s428 + $0x8] sm:$0xff] %vm760, %v891
      %913 = vst.msk [vmem:[%s428 + $0x10] sm:$0xff] %vm760, %v894
      %914 = vst.msk [vmem:[%s428 + $0x18] sm:$0xff] %vm760, %v897
      %915 = vst.msk [vmem:[%s428 + $0x20] sm:$0xff] %vm760, %v900
      %916 = vst.msk [vmem:[%s428 + $0x28] sm:$0xff] %vm760, %v903
      %917 = vst.msk [vmem:[%s428 + $0x30] sm:$0xff] %vm760, %v906
      %918 = vst.msk [vmem:[%s428 + $0x38] sm:$0xff] %vm760, %v909
      %s919 = smul.u32 8, %s23
      %p920 = scmp.lt.s32.totalorder %s22, 1
      %s921 = scalar_select %p920, %s22, 1
      %p922 = scmp.lt.s32.totalorder %s919, 7
      %s923 = scalar_select %p922, %s919, 7
      %p924 = scmp.lt.s32.totalorder %s24, 0
      %s925 = scalar_select %p924, %s24, 0
      %s926 = sadd.s32 %s925, %s923
      %s927 = smul.addr %s921, 8
      %s928 = sadd.s32 %s926, %s927
      %s929 = smul.addr %s928, 8
      %s930 = scalar_lea.vmem %s6, %s929
      // Predicated region
      $region45: #{downsample.1} parent=43 // pred_check
        %p931 = pneg %p222
      $region46: #{downsample.1} parent=43 // pred_check_branch
        %933 = sbr.rel (%p931) target = $region48
      $region47: #{downsample.1} parent=43 // pred_region
        %s934 = smul.u32 8, %s23
      $region48: #{downsample.1} parent=43 // pred_fallthru
        _
    $region44: #{downsample.1} parent=5 // pred_fallthru
      _
    %p935 = scmp.le.s32.totalorder 2, %s12
    // Predicated region
    $region49: #{downsample.1} parent=5 // pred_check
      %p936 = pneg %p935
    $region50: #{downsample.1} parent=5 // pred_check_branch
      %938 = sbr.rel (%p936) target = $region52
    $region51: #{downsample.1} parent=5 // pred_region
      %s939 = ssub.s32 %s12, 2
      // Predicated region
      $region53: #{downsample.1} parent=51 // pred_check
        %p940 = pneg %p228
      $region54: #{downsample.1} parent=51 // pred_check_branch
        %942 = sbr.rel (%p940) target = $region56
      $region55: #{downsample.1} parent=51 // pred_region
        %s943 = smul.u32 8, %s26
        %p944 = scmp.lt.s32.totalorder %s25, 1
        %s945 = scalar_select %p944, %s25, 1
        %p946 = scmp.lt.s32.totalorder %s943, 7
        %s947 = scalar_select %p946, %s943, 7
        %p948 = scmp.lt.s32.totalorder %s27, 0
        %s949 = scalar_select %p948, %s27, 0
        %s950 = sadd.s32 %s949, %s947
        %s951 = smul.addr %s945, 8
        %s952 = sadd.s32 %s950, %s951
        %s953 = smul.addr %s952, 8
        %s954 = scalar_lea.vmem %s6, %s953
      $region56: #{downsample.1} parent=51 // pred_fallthru
        _
    $region52: #{downsample.1} parent=5 // pred_fallthru
      _
  $region6: #{downsample.1} parent=0 // loop_footer
    %s16 = sadd.s32 1, %s12
  $region7: #{downsample.1} parent=0 // loop_footer_branch
    %11 = sbr.rel target = $region3
  $region8: #{downsample.1} parent=0 // loop_exit
    _

</llo_original>
